<compile_context>
chip_gen: v6e
topology: v6e:2x2x1
jax: 0.10.0
libtpu: 0.0.40
codegen_flags: <defaults>
</compile_context>

<pallas_src>
import math

import jax
import jax.numpy as jnp
import numpy as np
from jax.experimental import pallas as pl
from jax.experimental.pallas import tpu as pltpu

_HIGHEST = jax.lax.Precision.HIGHEST


def fwe_mxu_kernel(x_ref, cat_ref, expand_ref, fwe_w_ref, fwe_b_ref, alpha_ref,
                   wblk_ref, tok_b_ref, cat_b_ref, o_ref):
    """MXU path: FWE + PReLU at (Bt, F*C) width, block-diagonal MXU projection.

      x_ref      : VMEM (Bt, F)          numerical inputs for this batch tile
      cat_ref    : VMEM (Bt, n_cat*D)    XLA-gathered categorical embeddings
      expand_ref : VMEM (F, F*C)         0/1 rows, expand[f, f*C + c] = 1
      fwe_w_ref  : VMEM (1, F*C)         FWE weight, flattened [f*C + c]
      fwe_b_ref  : VMEM (1, F*C)         FWE bias,   flattened [f*C + c]
      alpha_ref  : VMEM (1, 1)           PReLU slope (single shared slope)
      wblk_ref   : VMEM (F*C, TOTD)      block-diag tok_w, n_cat*D zero cols first
      tok_b_ref  : VMEM (1, TOTD)        numeric token bias (zero-prefixed)
      cat_b_ref  : VMEM (1, n_cat*D)     categorical token bias
      o_ref      : VMEM (Bt, TOTD)       full fused token slab, lane-dense
    """
    ncd = cat_ref.shape[1]
    x = x_ref[...].astype(jnp.float32)                          # (Bt, F)

    # Replicate x[b, f] -> x_fc[b, f*C + c] on the MXU.  0/1 matrix + HIGHEST
    # precision makes this bit-exact (every product is x*1 or x*0).
    x_fc = jax.lax.dot(x, expand_ref[...], precision=_HIGHEST,
                       preferred_element_type=jnp.float32)      # (Bt, F*C)

    # Feature-wise embedding + PReLU on the small (Bt, F*C) pre-activation (VPU).
    u = x_fc * fwe_w_ref[...] + fwe_b_ref[...]
    alpha = alpha_ref[...]                                      # (1, 1), broadcasts
    v = jnp.where(u >= 0, u, alpha * u)

    # Block-diagonal tokenizer projection on the MXU.  The weight carries n_cat*D
    # zero columns in front, so numeric tokens land directly at their final lane
    # offsets: the store below is a full-width aligned store (fused concat).
    full = jax.lax.dot(v, wblk_ref[...], precision=_HIGHEST,
                       preferred_element_type=jnp.float32) + tok_b_ref[...]
    o_ref[...] = full.astype(o_ref.dtype)

    # Overwrite the (zero) categorical lane range with gathered embeddings + their
    # token bias: offset-0 masked store, always aligned.
    o_ref[:, :ncd] = (cat_ref[...].astype(jnp.float32)
                      + cat_b_ref[...]).astype(o_ref.dtype)


def fwe_vpu_kernel(x_ref, cat_ref, expand_ref, fwe_w_ref, fwe_b_ref,
                   tok_w_ref, tok_w_a_ref, tok_b_ref, cat_b_ref, o_ref):
    """VPU fallback for large F (block-diag weight too big to keep VMEM-resident).

    Lane-dense over the full TOTD = n_cat*D + F*D axis (n_cat*D zero-prefix lanes
    compute zeros and are overwritten by the categorical store).  PReLU slope is
    folded into the pre-scaled tok_w copy (tok_w_a_ref), saving VALU ops.
    """
    ncd = cat_ref.shape[1]
    n_channels = fwe_w_ref.shape[0]
    x = x_ref[...].astype(jnp.float32)                          # (Bt, F)

    # MXU replication x[b, f] -> x_exp[b, ncd + f*D + d]; zero in the cat lanes.
    x_exp = jax.lax.dot(x, expand_ref[...], precision=_HIGHEST,
                        preferred_element_type=jnp.float32)     # (Bt, TOTD)

    w, b = fwe_w_ref[...], fwe_b_ref[...]
    tw, twa = tok_w_ref[...], tok_w_a_ref[...]
    acc = jnp.broadcast_to(tok_b_ref[...], x_exp.shape)

    # Unrolled tiny-C VPU contraction; PReLU realized by selecting tok_w vs
    # alpha*tok_w (one select, no separate alpha*u multiply).
    for c in range(n_channels):
        u = x_exp * w[c][None, :] + b[c][None, :]
        acc = acc + u * jnp.where(u >= 0, tw[c][None, :], twa[c][None, :])

    o_ref[...] = acc.astype(o_ref.dtype)
    o_ref[:, :ncd] = (cat_ref[...].astype(jnp.float32)
                      + cat_b_ref[...]).astype(o_ref.dtype)


def _pick_batch_tile(batch, per_row_bytes, resident_bytes):
    """Batch rows per grid step.

    Keeps the double-buffered x / cat / out tiles plus resident per-feature params
    under ~24 MiB (safe for v7x's 64 MiB physical / 32 MiB scoped-default VMEM;
    v5e/v6e have 128 MiB), while allowing up to 8K-row tiles to amortize the
    ~0.35 us fixed per-grid-step overhead.  For batch >= 16 the tile is capped so
    the grid has >= 2 steps and v7x's two TensorCores both get work.
    """
    if batch <= 8:
        return batch                                   # block == full dim is legal
    budget = 24 * 1024 * 1024
    avail = max(budget - resident_bytes, 2 * 1024 * 1024)
    bt = min(8192, max(8, avail // max(per_row_bytes, 1)))
    if batch >= 16:
        bt = min(bt, max(8, (batch + 1) // 2))         # >= 2 grid steps (v7x megacore)
    bt = min(bt, batch)
    return max(8, (bt // 8) * 8)                       # multiple of 8 sublanes


def feature_wise_embedding(x_num, x_cat, params, *, batch_tile=None,
                           use_mxu_contraction=None, out_dtype=jnp.float32):
    """Full FeatureWiseEmbedding forward.  Returns (B, n_cat + F, D)."""
    B, F = x_num.shape
    C = params['fwe_w'].shape[1]
    D = params['tok_w'].shape[-1]
    n_cat = int(params['category_offsets'].shape[0])
    # TODO(synk): categories=None (no categorical slab) would need a second kernel
    # signature; only the with-categories module configuration is implemented.
    assert n_cat >= 1
    FD, FC, NCD = F * D, F * C, n_cat * D
    TOTD = NCD + FD
    f32 = jnp.float32
    alpha = params['alpha'].reshape(())

    # ---- glue kept in XLA: data-dependent categorical gather ----
    cat_idx = x_cat + params['category_offsets'][None, :]           # (B, n_cat)
    cat_flat = params['cat_emb'][cat_idx].reshape(B, NCD)           # (B, n_cat*D)

    # ---- wrapper-side layout plumbing (weight-sized, once per trace) ----
    cat_b = params['tok_bias'][:n_cat].reshape(1, NCD).astype(f32)
    tok_b_wide = jnp.pad(params['tok_bias'][n_cat:].reshape(1, FD).astype(f32),
                         ((0, 0), (NCD, 0)))                         # (1, TOTD)

    wblk_bytes = FC * TOTD * 4
    if use_mxu_contraction is None:
        use_mxu_contraction = wblk_bytes <= 16 * 1024 * 1024
    # TODO(synk): for F so large that neither the block-diagonal weight nor the
    # (F, TOTD) expansion matrix fits resident VMEM, the feature axis would also
    # need tiling (not needed at these shapes).

    if use_mxu_contraction:
        expand_fc = jnp.repeat(jnp.eye(F, dtype=f32), C, axis=1)            # (F, FC)
        fwe_w_fc = params['fwe_w'].reshape(1, FC).astype(f32)
        fwe_b_fc = params['fwe_b'].reshape(1, FC).astype(f32)
        wblk = (jnp.eye(F, dtype=f32)[:, None, :, None]
                * params['tok_w'].astype(f32)[:, :, None, :]).reshape(FC, FD)
        wblk_wide = jnp.pad(wblk, ((0, 0), (NCD, 0)))                        # (FC, TOTD)
        alpha_11 = alpha.reshape(1, 1).astype(f32)
        kernel = fwe_mxu_kernel
        param_args = (expand_fc, fwe_w_fc, fwe_b_fc, alpha_11, wblk_wide,
                      tok_b_wide, cat_b)
        param_specs = [
            pl.BlockSpec((F, FC), lambda i: (0, 0)),
            pl.BlockSpec((1, FC), lambda i: (0, 0)),
            pl.BlockSpec((1, FC), lambda i: (0, 0)),
            pl.BlockSpec((1, 1), lambda i: (0, 0)),
            pl.BlockSpec((FC, TOTD), lambda i: (0, 0)),
            pl.BlockSpec((1, TOTD), lambda i: (0, 0)),
            pl.BlockSpec((1, NCD), lambda i: (0, 0)),
        ]
        flops = 2 * B * F * FC + 6 * B * FC + 2 * B * FC * TOTD
    else:
        expand_wide = jnp.pad(jnp.repeat(jnp.eye(F, dtype=f32), D, axis=1),
                              ((0, 0), (NCD, 0)))                            # (F, TOTD)
        fwe_w_wide = jnp.pad(jnp.broadcast_to(
            params['fwe_w'].T.astype(f32)[:, :, None], (C, F, D)).reshape(C, FD),
            ((0, 0), (NCD, 0)))
        fwe_b_wide = jnp.pad(jnp.broadcast_to(
            params['fwe_b'].T.astype(f32)[:, :, None], (C, F, D)).reshape(C, FD),
            ((0, 0), (NCD, 0)))
        tok_w_wide = jnp.pad(jnp.transpose(params['tok_w'].astype(f32),
                                           (1, 0, 2)).reshape(C, FD),
                             ((0, 0), (NCD, 0)))
        tok_w_a_wide = alpha.astype(f32) * tok_w_wide     # PReLU slope folded in
        kernel = fwe_vpu_kernel
        param_args = (expand_wide, fwe_w_wide, fwe_b_wide, tok_w_wide,
                      tok_w_a_wide, tok_b_wide, cat_b)
        param_specs = [
            pl.BlockSpec((F, TOTD), lambda i: (0, 0)),
            pl.BlockSpec((C, TOTD), lambda i: (0, 0)),
            pl.BlockSpec((C, TOTD), lambda i: (0, 0)),
            pl.BlockSpec((C, TOTD), lambda i: (0, 0)),
            pl.BlockSpec((C, TOTD), lambda i: (0, 0)),
            pl.BlockSpec((1, TOTD), lambda i: (0, 0)),
            pl.BlockSpec((1, NCD), lambda i: (0, 0)),
        ]
        flops = 2 * B * F * TOTD + 6 * B * C * TOTD

    resident_bytes = 2 * sum(int(np.prod(a.shape)) * 4 for a in param_args)
    per_row_bytes = 2 * 4 * (F + NCD + TOTD)      # double-buffered x + cat + out, f32
    bt = batch_tile if batch_tile is not None else _pick_batch_tile(
        B, per_row_bytes, resident_bytes)
    grid = (pl.cdiv(B, bt),)

    out_flat = pl.pallas_call(
        kernel,
        out_shape=jax.ShapeDtypeStruct((B, TOTD), out_dtype),
        grid=grid,
        in_specs=[
            pl.BlockSpec((bt, F), lambda i: (i, 0)),      # x_num (batch-pipelined)
            pl.BlockSpec((bt, NCD), lambda i: (i, 0)),    # gathered cat tokens
            *param_specs,                                 # per-feature params (resident)
        ],
        out_specs=pl.BlockSpec((bt, TOTD), lambda i: (i, 0)),
        compiler_params=pltpu.CompilerParams(
            dimension_semantics=("parallel",),            # v7x: shard batch over 2 TCs
            vmem_limit_bytes=48 * 1024 * 1024),
        cost_estimate=pl.CostEstimate(
            flops=flops, transcendentals=0,
            bytes_accessed=4 * (B * F + B * NCD + B * TOTD) + resident_bytes // 2),
    )(x_num, cat_flat, *param_args)

    return out_flat.reshape(B, n_cat + F, D)              # free row-major reshape


def reference_forward(x_num, x_cat, params):
    """Pure-JAX reference reproducing the PyTorch module."""
    alpha = params['alpha'][0]
    v = x_num[:, :, None] * params['fwe_w'][None] + params['fwe_b'][None]
    v = jnp.where(v >= 0, v, alpha * v)
    out_num = jnp.einsum('bfc,fcd->bfd', v, params['tok_w'],
                         precision=jax.lax.Precision.HIGHEST)
    cat_idx = x_cat + params['category_offsets'][None, :]
    cat_emb = params['cat_emb'][cat_idx]
    x = jnp.concatenate([cat_emb, out_num], axis=1)
    return x + params['tok_bias'][None]


def make_params(key, d_numerical, categories, channel_dim, d_token):
    n_cat = len(categories)
    d_bias = d_numerical + n_cat
    k = jax.random.split(key, 5)

    def kaiming_uniform(rng, shape, fan_in):
        # kaiming_uniform_(a=sqrt(5)) -> U(-bound, bound), bound = sqrt(6/((1+a^2)*fan_in))
        bound = math.sqrt(6.0 / ((1.0 + 5.0) * fan_in))
        return jax.random.uniform(rng, shape, jnp.float32, -bound, bound)

    params = {
        'fwe_w': jax.random.normal(k[0], (d_numerical, channel_dim), jnp.float32),
        'fwe_b': jnp.zeros((d_numerical, channel_dim), jnp.float32),
        'alpha': jnp.array([0.25], jnp.float32),  # nn.PReLU() default single slope
        'tok_w': kaiming_uniform(k[1], (d_numerical, channel_dim, d_token),
                                 fan_in=d_token),
        'tok_bias': kaiming_uniform(k[2], (d_bias, d_token), fan_in=d_token),
        'cat_emb': kaiming_uniform(k[3], (sum(categories), d_token), fan_in=d_token),
        'category_offsets': jnp.array(
            np.concatenate([[0], np.cumsum(categories)[:-1]]), jnp.int32),
    }
    return params, k[4]


if __name__ == "__main__":
    B = 8
    d_numerical = 4          # F
    channel_dim = 5          # C ("d" of the Tokenizer)
    d_token = 32             # D
    categories = [3, 5]      # two categorical features

    key = jax.random.PRNGKey(0)
    params, key = make_params(key, d_numerical, categories, channel_dim, d_token)

    kx, kc = jax.random.split(key)
    x_num = jax.random.normal(kx, (B, d_numerical), jnp.float32)
    x_cat = jnp.stack(
        [jax.random.randint(jax.random.fold_in(kc, i), (B,), 0, categories[i])
         for i in range(len(categories))], axis=1).astype(jnp.int32)   # (B, n_cat)

    ref = reference_forward(x_num, x_cat, params)

    # Primary (MXU block-diagonal) path.
    out = jax.block_until_ready(feature_wise_embedding(x_num, x_cat, params))
    np.testing.assert_allclose(np.asarray(out), np.asarray(ref),
                               rtol=1e-5, atol=1e-5)
    assert out.shape == (B, len(categories) + d_numerical, d_token)

    # Large-F fallback (VPU C-loop with folded PReLU slope) — validate it too.
    out_vpu = jax.block_until_ready(
        feature_wise_embedding(x_num, x_cat, params, use_mxu_contraction=False))
    np.testing.assert_allclose(np.asarray(out_vpu), np.asarray(ref),
                               rtol=1e-5, atol=1e-5)

    print("KERNEL_OK")
</pallas_src>

<mosaic_0001>
module attributes {stable_mosaic.version = 11 : i64} {
  func.func @fwe_mxu_kernel(%arg0: i32, %arg1: memref<8x4xf32, #tpu.memory_space<vmem>>, %arg2: memref<8x64xf32, #tpu.memory_space<vmem>>, %arg3: memref<4x20xf32, #tpu.memory_space<vmem>>, %arg4: memref<1x20xf32, #tpu.memory_space<vmem>>, %arg5: memref<1x20xf32, #tpu.memory_space<vmem>>, %arg6: memref<1x1xf32, #tpu.memory_space<vmem>>, %arg7: memref<20x192xf32, #tpu.memory_space<vmem>>, %arg8: memref<1x192xf32, #tpu.memory_space<vmem>>, %arg9: memref<1x64xf32, #tpu.memory_space<vmem>>, %arg10: memref<8x192xf32, #tpu.memory_space<vmem>>) attributes {dimension_semantics = [#tpu.dimension_semantics<parallel>], iteration_bounds = array<i64: 1>, scalar_prefetch = 0 : i64, scratch_operands = 0 : i64, tpu.core_type = #tpu.core_type<tc>, window_params = [{transform_indices = @transform_0, window_bounds = array<i64: 8, 4>}, {transform_indices = @transform_1, window_bounds = array<i64: 8, 64>}, {pipeline_mode = #tpu.pipeline_mode<synchronous>, transform_indices = @transform_2, window_bounds = array<i64: 4, 20>}, {pipeline_mode = #tpu.pipeline_mode<synchronous>, transform_indices = @transform_3, window_bounds = array<i64: 1, 20>}, {pipeline_mode = #tpu.pipeline_mode<synchronous>, transform_indices = @transform_4, window_bounds = array<i64: 1, 20>}, {pipeline_mode = #tpu.pipeline_mode<synchronous>, transform_indices = @transform_5, window_bounds = array<i64: 1, 1>}, {pipeline_mode = #tpu.pipeline_mode<synchronous>, transform_indices = @transform_6, window_bounds = array<i64: 20, 192>}, {pipeline_mode = #tpu.pipeline_mode<synchronous>, transform_indices = @transform_7, window_bounds = array<i64: 1, 192>}, {pipeline_mode = #tpu.pipeline_mode<synchronous>, transform_indices = @transform_8, window_bounds = array<i64: 1, 64>}, {transform_indices = @transform_9, window_bounds = array<i64: 8, 192>}]} {
    %c0 = arith.constant 0 : index
    %c0_0 = arith.constant 0 : index
    %0 = vector.load %arg1[%c0, %c0_0] : memref<8x4xf32, #tpu.memory_space<vmem>>, vector<8x4xf32>
    %c0_1 = arith.constant 0 : index
    %c0_2 = arith.constant 0 : index
    %1 = vector.load %arg3[%c0_1, %c0_2] : memref<4x20xf32, #tpu.memory_space<vmem>>, vector<4x20xf32>
    %cst = arith.constant dense<0.000000e+00> : vector<8x20xf32>
    %2 = tpu.matmul %0, %1, %cst {dimension_numbers = #tpu.dot_dimension_numbers<[1], [0], [0], [1], [0, 0, 1, 1], [], []>, precision = #tpu.contract_precision<fp32>} : vector<8x4xf32>, vector<4x20xf32>, vector<8x20xf32> -> vector<8x20xf32>
    %c0_3 = arith.constant 0 : index
    %c0_4 = arith.constant 0 : index
    %3 = vector.load %arg4[%c0_3, %c0_4] : memref<1x20xf32, #tpu.memory_space<vmem>>, vector<1x20xf32>
    %4 = vector.broadcast %3 : vector<1x20xf32> to vector<8x20xf32>
    %5 = arith.mulf %2, %4 : vector<8x20xf32>
    %c0_5 = arith.constant 0 : index
    %c0_6 = arith.constant 0 : index
    %6 = vector.load %arg5[%c0_5, %c0_6] : memref<1x20xf32, #tpu.memory_space<vmem>>, vector<1x20xf32>
    %7 = vector.broadcast %6 : vector<1x20xf32> to vector<8x20xf32>
    %8 = arith.addf %5, %7 : vector<8x20xf32>
    %c0_7 = arith.constant 0 : index
    %c0_8 = arith.constant 0 : index
    %9 = vector.load %arg6[%c0_7, %c0_8] : memref<1x1xf32, #tpu.memory_space<vmem>>, vector<1x1xf32>
    %cst_9 = arith.constant 0.000000e+00 : f32
    %10 = vector.broadcast %cst_9 : f32 to vector<8x20xf32>
    %11 = arith.cmpf oge, %8, %10 : vector<8x20xf32>
    %12 = vector.broadcast %9 : vector<1x1xf32> to vector<8x20xf32>
    %13 = arith.mulf %12, %8 : vector<8x20xf32>
    %14 = arith.select %11, %8, %13 : vector<8x20xi1>, vector<8x20xf32>
    %c0_10 = arith.constant 0 : index
    %c0_11 = arith.constant 0 : index
    %15 = vector.load %arg7[%c0_10, %c0_11] : memref<20x192xf32, #tpu.memory_space<vmem>>, vector<20x192xf32>
    %cst_12 = arith.constant dense<0.000000e+00> : vector<8x192xf32>
    %16 = tpu.matmul %14, %15, %cst_12 {dimension_numbers = #tpu.dot_dimension_numbers<[1], [0], [0], [1], [0, 0, 1, 1], [], []>, precision = #tpu.contract_precision<fp32>} : vector<8x20xf32>, vector<20x192xf32>, vector<8x192xf32> -> vector<8x192xf32>
    %c0_13 = arith.constant 0 : index
    %c0_14 = arith.constant 0 : index
    %17 = vector.load %arg8[%c0_13, %c0_14] : memref<1x192xf32, #tpu.memory_space<vmem>>, vector<1x192xf32>
    %18 = vector.broadcast %17 : vector<1x192xf32> to vector<8x192xf32>
    %19 = arith.addf %16, %18 : vector<8x192xf32>
    %c0_15 = arith.constant 0 : index
    %c0_16 = arith.constant 0 : index
    %20 = vector.load %arg10[%c0_15, %c0_16] : memref<8x192xf32, #tpu.memory_space<vmem>>, vector<8x192xf32>
    tpu.vector_store %arg10[%c0_15, %c0_16], %19 {strides = array<i32>} : memref<8x192xf32, #tpu.memory_space<vmem>>, vector<8x192xf32>,
    %c0_17 = arith.constant 0 : index
    %c0_18 = arith.constant 0 : index
    %21 = vector.load %arg2[%c0_17, %c0_18] : memref<8x64xf32, #tpu.memory_space<vmem>>, vector<8x64xf32>
    %c0_19 = arith.constant 0 : index
    %c0_20 = arith.constant 0 : index
    %22 = vector.load %arg9[%c0_19, %c0_20] : memref<1x64xf32, #tpu.memory_space<vmem>>, vector<1x64xf32>
    %23 = vector.broadcast %22 : vector<1x64xf32> to vector<8x64xf32>
    %24 = arith.addf %21, %23 : vector<8x64xf32>
    %c0_21 = arith.constant 0 : index
    %c0_22 = arith.constant 0 : index
    %25 = vector.load %arg10[%c0_21, %c0_22] : memref<8x192xf32, #tpu.memory_space<vmem>>, vector<8x64xf32>
    tpu.vector_store %arg10[%c0_21, %c0_22], %24 {strides = array<i32>} : memref<8x192xf32, #tpu.memory_space<vmem>>, vector<8x64xf32>,
    return
  }
  func.func @transform_0(%arg0: i32) -> (i32, i32) {
    %c0_i32 = arith.constant 0 : i32
    %c0_i32_0 = arith.constant 0 : i32
    return %arg0, %c0_i32 : i32, i32
  }
  func.func @transform_1(%arg0: i32) -> (i32, i32) {
    %c0_i32 = arith.constant 0 : i32
    %c0_i32_0 = arith.constant 0 : i32
    return %arg0, %c0_i32 : i32, i32
  }
  func.func @transform_2(%arg0: i32) -> (i32, i32) {
    %c0_i32 = arith.constant 0 : i32
    %c0_i32_0 = arith.constant 0 : i32
    %c0_i32_1 = arith.constant 0 : i32
    return %c0_i32, %c0_i32_0 : i32, i32
  }
  func.func @transform_3(%arg0: i32) -> (i32, i32) {
    %c0_i32 = arith.constant 0 : i32
    %c0_i32_0 = arith.constant 0 : i32
    %c0_i32_1 = arith.constant 0 : i32
    return %c0_i32, %c0_i32_0 : i32, i32
  }
  func.func @transform_4(%arg0: i32) -> (i32, i32) {
    %c0_i32 = arith.constant 0 : i32
    %c0_i32_0 = arith.constant 0 : i32
    %c0_i32_1 = arith.constant 0 : i32
    return %c0_i32, %c0_i32_0 : i32, i32
  }
  func.func @transform_5(%arg0: i32) -> (i32, i32) {
    %c0_i32 = arith.constant 0 : i32
    %c0_i32_0 = arith.constant 0 : i32
    %c0_i32_1 = arith.constant 0 : i32
    return %c0_i32, %c0_i32_0 : i32, i32
  }
  func.func @transform_6(%arg0: i32) -> (i32, i32) {
    %c0_i32 = arith.constant 0 : i32
    %c0_i32_0 = arith.constant 0 : i32
    %c0_i32_1 = arith.constant 0 : i32
    return %c0_i32, %c0_i32_0 : i32, i32
  }
  func.func @transform_7(%arg0: i32) -> (i32, i32) {
    %c0_i32 = arith.constant 0 : i32
    %c0_i32_0 = arith.constant 0 : i32
    %c0_i32_1 = arith.constant 0 : i32
    return %c0_i32, %c0_i32_0 : i32, i32
  }
  func.func @transform_8(%arg0: i32) -> (i32, i32) {
    %c0_i32 = arith.constant 0 : i32
    %c0_i32_0 = arith.constant 0 : i32
    %c0_i32_1 = arith.constant 0 : i32
    return %c0_i32, %c0_i32_0 : i32, i32
  }
  func.func @transform_9(%arg0: i32) -> (i32, i32) {
    %c0_i32 = arith.constant 0 : i32
    %c0_i32_0 = arith.constant 0 : i32
    return %arg0, %c0_i32 : i32, i32
  }
}

</mosaic_0001>

<llo_original>
// kernel: tpu_custom_call.1
$region0: #{tpu_custom_call.1}
  #allocation0 [shape = 'u32[]', space=smem, size = 0x4, offset = 0x4, fixed_abs, tag = 'smem constant byte address 0x4 - core index']
  #allocation1 [shape = 'u32[144,128]{1,0:T(1,128)}', space=vmem, size = 0x12000, scoped, tag = 'internal scratch']
  #allocation2 [shape = 'f32[1,1]{1,0:T(1,128)S(1)}', space=vmem, size = 0x200, scoped, tag = 'scoped memory for tpu_custom_call.1']
  %s0 = inlined_call_operand.vmem [shape: f32[8,4], index: 0, kind: input, shape index: {}]
  %s1 = inlined_call_operand.vmem [shape: f32[8,64], index: 1, kind: input, shape index: {}]
  %s2 = inlined_call_operand.vmem [shape: f32[4,20], index: 2, kind: input, shape index: {}]
  %s3 = inlined_call_operand.vmem [shape: f32[1,20], index: 3, kind: input, shape index: {}]
  %s4 = inlined_call_operand.vmem [shape: f32[1,20], index: 4, kind: input, shape index: {}]
  %s5 = inlined_call_operand.<no memory space> [shape: f32[1,1], index: 5, kind: input, shape index: {}]
  %s6 = inlined_call_operand.hbm [shape: f32[20,192], index: 6, kind: input, shape index: {}]
  %s7 = inlined_call_operand.vmem [shape: f32[1,192], index: 7, kind: input, shape index: {}]
  %s8 = inlined_call_operand.vmem [shape: f32[1,64], index: 8, kind: input, shape index: {}]
  %s9 = inlined_call_operand.hbm [shape: f32[8,192], index: 9, kind: output, shape index: {}]
  %s10 = sld [smem:[#allocation0]]
  $region50: #{tpu_custom_call.1} parent=0
    _
  %s12 = ssub.s32 1, %s10
  %s13 = scalar_select 0, %s12, %s10
  %v14 = vstv %s5
  %15 = vst [vmem:[#allocation2] sm:$0x1] %v14
  $region1: #{tpu_custom_call.1} parent=0
    #allocation3 [shape = 'u8[24576]{0}', space=vmem, size = 0x6000, scoped, tag = 'input window, operand 6, single buffered']
    #allocation4 [shape = 's32[1]{0}', space=sflag, size = 0x4, scoped, tag = 'scoped memory for tpu_custom_call.1']
    #allocation5 [shape = 's32[1]{0}', space=sflag, size = 0x4, scoped, tag = 'scoped memory for tpu_custom_call.1']
    #allocation6 [shape = 'u8[8192]{0}', space=vmem, size = 0x2000, scoped, tag = 'output window, operand 0, single buffered']
    %16 = vsyncpa [#allocation4], 0
    %17 = vsyncpa [#allocation5], 0
    // Predicated region
    $region2: #{tpu_custom_call.1} parent=1 // pred_check
      _
    $region3: #{tpu_custom_call.1} parent=1 // pred_check_branch
      %19 = sbr.rel (0) target = $region5
    $region4: #{tpu_custom_call.1} parent=1 // pred_region
      _
    $region5: #{tpu_custom_call.1} parent=1 // pred_fallthru
      _
    // Predicated region
    $region6: #{tpu_custom_call.1} parent=1 // pred_check
      _
    $region7: #{tpu_custom_call.1} parent=1 // pred_check_branch
      %21 = sbr.rel (0) target = $region9
    $region8: #{tpu_custom_call.1} parent=1 // pred_region
      _
    $region9: #{tpu_custom_call.1} parent=1 // pred_fallthru
      _
    // Predicated region
    $region10: #{tpu_custom_call.1} parent=1 // pred_check
      _
    $region11: #{tpu_custom_call.1} parent=1 // pred_check_branch
      %23 = sbr.rel (0) target = $region13
    $region12: #{tpu_custom_call.1} parent=1 // pred_region
      _
    $region13: #{tpu_custom_call.1} parent=1 // pred_fallthru
      _
    // Predicated region
    $region14: #{tpu_custom_call.1} parent=1 // pred_check
      _
    $region15: #{tpu_custom_call.1} parent=1 // pred_check_branch
      %25 = sbr.rel (0) target = $region17
    $region16: #{tpu_custom_call.1} parent=1 // pred_region
      _
    $region17: #{tpu_custom_call.1} parent=1 // pred_fallthru
      _
    // Predicated region
    $region18: #{tpu_custom_call.1} parent=1 // pred_check
      _
    $region19: #{tpu_custom_call.1} parent=1 // pred_check_branch
      %27 = sbr.rel (0) target = $region21
    $region20: #{tpu_custom_call.1} parent=1 // pred_region
      _
    $region21: #{tpu_custom_call.1} parent=1 // pred_fallthru
      _
    // Predicated region
    $region22: #{tpu_custom_call.1} parent=1 // pred_check
      _
    $region23: #{tpu_custom_call.1} parent=1 // pred_check_branch
      %29 = sbr.rel (0) target = $region25
    $region24: #{tpu_custom_call.1} parent=1 // pred_region
      _
    $region25: #{tpu_custom_call.1} parent=1 // pred_fallthru
      _
    // Predicated region
    $region26: #{tpu_custom_call.1} parent=1 // pred_check
      _
    $region27: #{tpu_custom_call.1} parent=1 // pred_check_branch
      %31 = sbr.rel (0) target = $region29
    $region28: #{tpu_custom_call.1} parent=1 // pred_region
      %s33 = ssub.s32 768, 768
      %34 = vsyncadd [#allocation4], %s33
      %s35 = sshll.u32 [#allocation3], 4
      %s36 = int_to_ptr.vmem [resolvable:$true] %s35
      %41 = dma.hbm_to_vmem [thread:$0]  %s6, 768, %s36, [#allocation4], 256, 256, 16
    $region29: #{tpu_custom_call.1} parent=1 // pred_fallthru
      _
    // Predicated region
    $region30: #{tpu_custom_call.1} parent=1 // pred_check
      _
    $region31: #{tpu_custom_call.1} parent=1 // pred_check_branch
      %43 = sbr.rel (0) target = $region33
    $region32: #{tpu_custom_call.1} parent=1 // pred_region
      _
    $region33: #{tpu_custom_call.1} parent=1 // pred_fallthru
      _
    // Predicated region
    $region34: #{tpu_custom_call.1} parent=1 // pred_check
      _
    $region35: #{tpu_custom_call.1} parent=1 // pred_check_branch
      %45 = sbr.rel (0) target = $region37
    $region36: #{tpu_custom_call.1} parent=1 // pred_region
      _
    $region37: #{tpu_custom_call.1} parent=1 // pred_fallthru
      _
    // Predicated region
    $region38: #{tpu_custom_call.1} parent=1 // pred_check
      _
    $region39: #{tpu_custom_call.1} parent=1 // pred_check_branch
      %47 = sbr.rel (0) target = $region41
    $region40: #{tpu_custom_call.1} parent=1 // pred_region
      %48 = dma.done [#allocation4], 768
    $region41: #{tpu_custom_call.1} parent=1 // pred_fallthru
      _
    %v49 = vld [vmem:[%s0] sm:$0xff]
    %v50 = vld [vmem:[%s2] sm:$0xf]
    %vm51 = vcmask 31744
    %v53 = vsel %vm51, %v49, 0
    %vm55 = vcmask 1043456
    %v57 = vsel %vm55, %v50, 0
    %59 = vmatprep.subr.mxu0 0.0
    %60 = vmatpush1.msra.mxu0 0.0
    %61 = vmatprep.subr.mxu0 0.0
    %62 = vmatpush1.msra.mxu0 0.0
    %63 = vmatprep.subr.mxu0 0.0
    %64 = vmatpush1.msra.mxu0 0.0
    %65 = vmatprep.subr.mxu0 0.0
    %66 = vmatpush1.msra.mxu0 0.0
    %67 = vmatprep.subr.mxu0 0.0
    %68 = vmatpush1.msra.mxu0 0.0
    %69 = vmatprep.subr.mxu0 0.0
    %70 = vmatpush1.msra.mxu0 0.0
    %71 = vmatprep.subr.mxu0 0.0
    %72 = vmatpush1.msra.mxu0 0.0
    %73 = vmatprep.subr.mxu0 0.0
    %74 = vmatpush1.msra.mxu0 0.0
    %75 = vmatprep.subr.mxu0 0.0
    %76 = vmatpush1.msra.mxu0 0.0
    %77 = vmatprep.subr.mxu0 0.0
    %78 = vmatpush1.msra.mxu0 0.0
    %79 = vmatprep.subr.mxu0 0.0
    %80 = vmatpush1.msra.mxu0 0.0
    %81 = vmatprep.subr.mxu0 0.0
    %82 = vmatpush1.msra.mxu0 0.0
    %83 = vmatprep.subr.mxu0 0.0
    %84 = vmatpush1.msra.mxu0 0.0
    %85 = vmatprep.subr.mxu0 0.0
    %86 = vmatpush1.msra.mxu0 0.0
    %87 = vmatprep.subr.mxu0 0.0
    %88 = vmatpush1.msra.mxu0 0.0
    %89 = vmatprep.subr.mxu0 0.0
    %v90 = vand.u32 %v57, 4294901760
    %91 = vmatpush1.msra.mxu0 %v90
    %92 = vmatprep.subr.mxu0 0.0
    %93 = vmatpush2.msra.mxu0 0.0
    %94 = vmatprep.subr.mxu0 0.0
    %95 = vmatpush2.msra.mxu0 0.0
    %96 = vmatprep.subr.mxu0 0.0
    %97 = vmatpush2.msra.mxu0 0.0
    %98 = vmatprep.subr.mxu0 0.0
    %99 = vmatpush2.msra.mxu0 0.0
    %100 = vmatprep.subr.mxu0 0.0
    %101 = vmatpush2.msra.mxu0 0.0
    %102 = vmatprep.subr.mxu0 0.0
    %103 = vmatpush2.msra.mxu0 0.0
    %104 = vmatprep.subr.mxu0 0.0
    %105 = vmatpush2.msra.mxu0 0.0
    %106 = vmatprep.subr.mxu0 0.0
    %107 = vmatpush2.msra.mxu0 0.0
    %108 = vmatprep.subr.mxu0 0.0
    %109 = vmatpush2.msra.mxu0 0.0
    %110 = vmatprep.subr.mxu0 0.0
    %111 = vmatpush2.msra.mxu0 0.0
    %112 = vmatprep.subr.mxu0 0.0
    %113 = vmatpush2.msra.mxu0 0.0
    %114 = vmatprep.subr.mxu0 0.0
    %115 = vmatpush2.msra.mxu0 0.0
    %116 = vmatprep.subr.mxu0 0.0
    %117 = vmatpush2.msra.mxu0 0.0
    %118 = vmatprep.subr.mxu0 0.0
    %119 = vmatpush2.msra.mxu0 0.0
    %120 = vmatprep.subr.mxu0 0.0
    %121 = vmatpush2.msra.mxu0 0.0
    %122 = vmatprep.subr.mxu0 0.0
    %123 = vmatpush2.msra.mxu0 0.0
    %124 = vmatprep.mubr.f32.mxu0 0.0
    %v125 = vand.u32 %v53, 4294901760
    %v126 = vsub.f32 %v53, %v125
    %v127 = vand.u32 %v126, 4294901760
    %v128 = vsub.f32 %v126, %v127
    %v129 = vand.u32 %v128, 4294901760
    %130 = vmatmul.mubr.f32.gmra.mxu0 %v129
    %v131 = vpop.f32.mrf.mxu0
    %v132 = vadd.f32 0.0, %v131
    %v133 = vpop.f32.mrf.mxu0
    %134 = vdwg.mxu0
    %135 = vmatprep.subr.mxu0 0.0
    %136 = vmatpush1.msra.mxu0 0.0
    %137 = vmatprep.subr.mxu0 0.0
    %138 = vmatpush1.msra.mxu0 0.0
    %139 = vmatprep.subr.mxu0 0.0
    %140 = vmatpush1.msra.mxu0 0.0
    %141 = vmatprep.subr.mxu0 0.0
    %142 = vmatpush1.msra.mxu0 0.0
    %143 = vmatprep.subr.mxu0 0.0
    %144 = vmatpush1.msra.mxu0 0.0
    %145 = vmatprep.subr.mxu0 0.0
    %146 = vmatpush1.msra.mxu0 0.0
    %147 = vmatprep.subr.mxu0 0.0
    %148 = vmatpush1.msra.mxu0 0.0
    %149 = vmatprep.subr.mxu0 0.0
    %150 = vmatpush1.msra.mxu0 0.0
    %151 = vmatprep.subr.mxu0 0.0
    %152 = vmatpush1.msra.mxu0 0.0
    %153 = vmatprep.subr.mxu0 0.0
    %154 = vmatpush1.msra.mxu0 0.0
    %155 = vmatprep.subr.mxu0 0.0
    %156 = vmatpush1.msra.mxu0 0.0
    %157 = vmatprep.subr.mxu0 0.0
    %158 = vmatpush1.msra.mxu0 0.0
    %159 = vmatprep.subr.mxu0 0.0
    %160 = vmatpush1.msra.mxu0 0.0
    %161 = vmatprep.subr.mxu0 0.0
    %162 = vmatpush1.msra.mxu0 0.0
    %163 = vmatprep.subr.mxu0 0.0
    %164 = vmatpush1.msra.mxu0 0.0
    %165 = vmatprep.subr.mxu0 0.0
    %v166 = vand.u32 %v57, 4294901760
    %v167 = vsub.f32 %v57, %v166
    %v168 = vand.u32 %v167, 4294901760
    %v169 = vsub.f32 %v167, %v168
    %v170 = vand.u32 %v169, 4294901760
    %171 = vmatpush1.msra.mxu0 %v170
    %172 = vmatprep.subr.mxu0 0.0
    %173 = vmatpush2.msra.mxu0 0.0
    %174 = vmatprep.subr.mxu0 0.0
    %175 = vmatpush2.msra.mxu0 0.0
    %176 = vmatprep.subr.mxu0 0.0
    %177 = vmatpush2.msra.mxu0 0.0
    %178 = vmatprep.subr.mxu0 0.0
    %179 = vmatpush2.msra.mxu0 0.0
    %180 = vmatprep.subr.mxu0 0.0
    %181 = vmatpush2.msra.mxu0 0.0
    %182 = vmatprep.subr.mxu0 0.0
    %183 = vmatpush2.msra.mxu0 0.0
    %184 = vmatprep.subr.mxu0 0.0
    %185 = vmatpush2.msra.mxu0 0.0
    %186 = vmatprep.subr.mxu0 0.0
    %187 = vmatpush2.msra.mxu0 0.0
    %188 = vmatprep.subr.mxu0 0.0
    %189 = vmatpush2.msra.mxu0 0.0
    %190 = vmatprep.subr.mxu0 0.0
    %191 = vmatpush2.msra.mxu0 0.0
    %192 = vmatprep.subr.mxu0 0.0
    %193 = vmatpush2.msra.mxu0 0.0
    %194 = vmatprep.subr.mxu0 0.0
    %195 = vmatpush2.msra.mxu0 0.0
    %196 = vmatprep.subr.mxu0 0.0
    %197 = vmatpush2.msra.mxu0 0.0
    %198 = vmatprep.subr.mxu0 0.0
    %199 = vmatpush2.msra.mxu0 0.0
    %200 = vmatprep.subr.mxu0 0.0
    %201 = vmatpush2.msra.mxu0 0.0
    %202 = vmatprep.subr.mxu0 0.0
    %203 = vmatpush2.msra.mxu0 0.0
    %204 = vmatprep.mubr.f32.mxu0 0.0
    %v205 = vand.u32 %v53, 4294901760
    %206 = vmatmul.mubr.f32.gmra.mxu0 %v205
    %v207 = vpop.f32.mrf.mxu0
    %v208 = vadd.f32 %v132, %v207
    %v209 = vpop.f32.mrf.mxu0
    %210 = vdwg.mxu0
    %211 = vmatprep.subr.mxu0 0.0
    %212 = vmatpush1.msra.mxu0 0.0
    %213 = vmatprep.subr.mxu0 0.0
    %214 = vmatpush1.msra.mxu0 0.0
    %215 = vmatprep.subr.mxu0 0.0
    %216 = vmatpush1.msra.mxu0 0.0
    %217 = vmatprep.subr.mxu0 0.0
    %218 = vmatpush1.msra.mxu0 0.0
    %219 = vmatprep.subr.mxu0 0.0
    %220 = vmatpush1.msra.mxu0 0.0
    %221 = vmatprep.subr.mxu0 0.0
    %222 = vmatpush1.msra.mxu0 0.0
    %223 = vmatprep.subr.mxu0 0.0
    %224 = vmatpush1.msra.mxu0 0.0
    %225 = vmatprep.subr.mxu0 0.0
    %226 = vmatpush1.msra.mxu0 0.0
    %227 = vmatprep.subr.mxu0 0.0
    %228 = vmatpush1.msra.mxu0 0.0
    %229 = vmatprep.subr.mxu0 0.0
    %230 = vmatpush1.msra.mxu0 0.0
    %231 = vmatprep.subr.mxu0 0.0
    %232 = vmatpush1.msra.mxu0 0.0
    %233 = vmatprep.subr.mxu0 0.0
    %234 = vmatpush1.msra.mxu0 0.0
    %235 = vmatprep.subr.mxu0 0.0
    %236 = vmatpush1.msra.mxu0 0.0
    %237 = vmatprep.subr.mxu0 0.0
    %238 = vmatpush1.msra.mxu0 0.0
    %239 = vmatprep.subr.mxu0 0.0
    %240 = vmatpush1.msra.mxu0 0.0
    %241 = vmatprep.subr.mxu0 0.0
    %v242 = vand.u32 %v57, 4294901760
    %v243 = vsub.f32 %v57, %v242
    %244 = vmatpush1.msra.mxu0 %v243
    %245 = vmatprep.subr.mxu0 0.0
    %246 = vmatpush2.msra.mxu0 0.0
    %247 = vmatprep.subr.mxu0 0.0
    %248 = vmatpush2.msra.mxu0 0.0
    %249 = vmatprep.subr.mxu0 0.0
    %250 = vmatpush2.msra.mxu0 0.0
    %251 = vmatprep.subr.mxu0 0.0
    %252 = vmatpush2.msra.mxu0 0.0
    %253 = vmatprep.subr.mxu0 0.0
    %254 = vmatpush2.msra.mxu0 0.0
    %255 = vmatprep.subr.mxu0 0.0
    %256 = vmatpush2.msra.mxu0 0.0
    %257 = vmatprep.subr.mxu0 0.0
    %258 = vmatpush2.msra.mxu0 0.0
    %259 = vmatprep.subr.mxu0 0.0
    %260 = vmatpush2.msra.mxu0 0.0
    %261 = vmatprep.subr.mxu0 0.0
    %262 = vmatpush2.msra.mxu0 0.0
    %263 = vmatprep.subr.mxu0 0.0
    %264 = vmatpush2.msra.mxu0 0.0
    %265 = vmatprep.subr.mxu0 0.0
    %266 = vmatpush2.msra.mxu0 0.0
    %267 = vmatprep.subr.mxu0 0.0
    %268 = vmatpush2.msra.mxu0 0.0
    %269 = vmatprep.subr.mxu0 0.0
    %270 = vmatpush2.msra.mxu0 0.0
    %271 = vmatprep.subr.mxu0 0.0
    %272 = vmatpush2.msra.mxu0 0.0
    %273 = vmatprep.subr.mxu0 0.0
    %274 = vmatpush2.msra.mxu0 0.0
    %275 = vmatprep.subr.mxu0 0.0
    %276 = vmatpush2.msra.mxu0 0.0
    %277 = vmatprep.mubr.f32.mxu0 0.0
    %v278 = vand.u32 %v53, 4294901760
    %v279 = vsub.f32 %v53, %v278
    %280 = vmatmul.mubr.f32.gmra.mxu0 %v279
    %v281 = vpop.f32.mrf.mxu0
    %v282 = vadd.f32 %v208, %v281
    %v283 = vpop.f32.mrf.mxu0
    %284 = vdwg.mxu0
    %285 = vmatprep.subr.mxu0 0.0
    %286 = vmatpush1.msra.mxu0 0.0
    %287 = vmatprep.subr.mxu0 0.0
    %288 = vmatpush1.msra.mxu0 0.0
    %289 = vmatprep.subr.mxu0 0.0
    %290 = vmatpush1.msra.mxu0 0.0
    %291 = vmatprep.subr.mxu0 0.0
    %292 = vmatpush1.msra.mxu0 0.0
    %293 = vmatprep.subr.mxu0 0.0
    %294 = vmatpush1.msra.mxu0 0.0
    %295 = vmatprep.subr.mxu0 0.0
    %296 = vmatpush1.msra.mxu0 0.0
    %297 = vmatprep.subr.mxu0 0.0
    %298 = vmatpush1.msra.mxu0 0.0
    %299 = vmatprep.subr.mxu0 0.0
    %300 = vmatpush1.msra.mxu0 0.0
    %301 = vmatprep.subr.mxu0 0.0
    %302 = vmatpush1.msra.mxu0 0.0
    %303 = vmatprep.subr.mxu0 0.0
    %304 = vmatpush1.msra.mxu0 0.0
    %305 = vmatprep.subr.mxu0 0.0
    %306 = vmatpush1.msra.mxu0 0.0
    %307 = vmatprep.subr.mxu0 0.0
    %308 = vmatpush1.msra.mxu0 0.0
    %309 = vmatprep.subr.mxu0 0.0
    %310 = vmatpush1.msra.mxu0 0.0
    %311 = vmatprep.subr.mxu0 0.0
    %312 = vmatpush1.msra.mxu0 0.0
    %313 = vmatprep.subr.mxu0 0.0
    %314 = vmatpush1.msra.mxu0 0.0
    %315 = vmatprep.subr.mxu0 0.0
    %v316 = vand.u32 %v57, 4294901760
    %317 = vmatpush1.msra.mxu0 %v316
    %318 = vmatprep.subr.mxu0 0.0
    %319 = vmatpush2.msra.mxu0 0.0
    %320 = vmatprep.subr.mxu0 0.0
    %321 = vmatpush2.msra.mxu0 0.0
    %322 = vmatprep.subr.mxu0 0.0
    %323 = vmatpush2.msra.mxu0 0.0
    %324 = vmatprep.subr.mxu0 0.0
    %325 = vmatpush2.msra.mxu0 0.0
    %326 = vmatprep.subr.mxu0 0.0
    %327 = vmatpush2.msra.mxu0 0.0
    %328 = vmatprep.subr.mxu0 0.0
    %329 = vmatpush2.msra.mxu0 0.0
    %330 = vmatprep.subr.mxu0 0.0
    %331 = vmatpush2.msra.mxu0 0.0
    %332 = vmatprep.subr.mxu0 0.0
    %333 = vmatpush2.msra.mxu0 0.0
    %334 = vmatprep.subr.mxu0 0.0
    %335 = vmatpush2.msra.mxu0 0.0
    %336 = vmatprep.subr.mxu0 0.0
    %337 = vmatpush2.msra.mxu0 0.0
    %338 = vmatprep.subr.mxu0 0.0
    %339 = vmatpush2.msra.mxu0 0.0
    %340 = vmatprep.subr.mxu0 0.0
    %341 = vmatpush2.msra.mxu0 0.0
    %342 = vmatprep.subr.mxu0 0.0
    %343 = vmatpush2.msra.mxu0 0.0
    %344 = vmatprep.subr.mxu0 0.0
    %345 = vmatpush2.msra.mxu0 0.0
    %346 = vmatprep.subr.mxu0 0.0
    %347 = vmatpush2.msra.mxu0 0.0
    %348 = vmatprep.subr.mxu0 0.0
    %349 = vmatpush2.msra.mxu0 0.0
    %350 = vmatprep.mubr.f32.mxu0 0.0
    %v351 = vand.u32 %v53, 4294901760
    %v352 = vsub.f32 %v53, %v351
    %v353 = vand.u32 %v352, 4294901760
    %354 = vmatmul.mubr.f32.gmra.mxu0 %v353
    %v355 = vpop.f32.mrf.mxu0
    %v356 = vadd.f32 %v282, %v355
    %v357 = vpop.f32.mrf.mxu0
    %358 = vdwg.mxu0
    %359 = vmatprep.subr.mxu0 0.0
    %360 = vmatpush1.msra.mxu0 0.0
    %361 = vmatprep.subr.mxu0 0.0
    %362 = vmatpush1.msra.mxu0 0.0
    %363 = vmatprep.subr.mxu0 0.0
    %364 = vmatpush1.msra.mxu0 0.0
    %365 = vmatprep.subr.mxu0 0.0
    %366 = vmatpush1.msra.mxu0 0.0
    %367 = vmatprep.subr.mxu0 0.0
    %368 = vmatpush1.msra.mxu0 0.0
    %369 = vmatprep.subr.mxu0 0.0
    %370 = vmatpush1.msra.mxu0 0.0
    %371 = vmatprep.subr.mxu0 0.0
    %372 = vmatpush1.msra.mxu0 0.0
    %373 = vmatprep.subr.mxu0 0.0
    %374 = vmatpush1.msra.mxu0 0.0
    %375 = vmatprep.subr.mxu0 0.0
    %376 = vmatpush1.msra.mxu0 0.0
    %377 = vmatprep.subr.mxu0 0.0
    %378 = vmatpush1.msra.mxu0 0.0
    %379 = vmatprep.subr.mxu0 0.0
    %380 = vmatpush1.msra.mxu0 0.0
    %381 = vmatprep.subr.mxu0 0.0
    %382 = vmatpush1.msra.mxu0 0.0
    %383 = vmatprep.subr.mxu0 0.0
    %384 = vmatpush1.msra.mxu0 0.0
    %385 = vmatprep.subr.mxu0 0.0
    %386 = vmatpush1.msra.mxu0 0.0
    %387 = vmatprep.subr.mxu0 0.0
    %388 = vmatpush1.msra.mxu0 0.0
    %389 = vmatprep.subr.mxu0 0.0
    %v390 = vand.u32 %v57, 4294901760
    %v391 = vsub.f32 %v57, %v390
    %v392 = vand.u32 %v391, 4294901760
    %393 = vmatpush1.msra.mxu0 %v392
    %394 = vmatprep.subr.mxu0 0.0
    %395 = vmatpush2.msra.mxu0 0.0
    %396 = vmatprep.subr.mxu0 0.0
    %397 = vmatpush2.msra.mxu0 0.0
    %398 = vmatprep.subr.mxu0 0.0
    %399 = vmatpush2.msra.mxu0 0.0
    %400 = vmatprep.subr.mxu0 0.0
    %401 = vmatpush2.msra.mxu0 0.0
    %402 = vmatprep.subr.mxu0 0.0
    %403 = vmatpush2.msra.mxu0 0.0
    %404 = vmatprep.subr.mxu0 0.0
    %405 = vmatpush2.msra.mxu0 0.0
    %406 = vmatprep.subr.mxu0 0.0
    %407 = vmatpush2.msra.mxu0 0.0
    %408 = vmatprep.subr.mxu0 0.0
    %409 = vmatpush2.msra.mxu0 0.0
    %410 = vmatprep.subr.mxu0 0.0
    %411 = vmatpush2.msra.mxu0 0.0
    %412 = vmatprep.subr.mxu0 0.0
    %413 = vmatpush2.msra.mxu0 0.0
    %414 = vmatprep.subr.mxu0 0.0
    %415 = vmatpush2.msra.mxu0 0.0
    %416 = vmatprep.subr.mxu0 0.0
    %417 = vmatpush2.msra.mxu0 0.0
    %418 = vmatprep.subr.mxu0 0.0
    %419 = vmatpush2.msra.mxu0 0.0
    %420 = vmatprep.subr.mxu0 0.0
    %421 = vmatpush2.msra.mxu0 0.0
    %422 = vmatprep.subr.mxu0 0.0
    %423 = vmatpush2.msra.mxu0 0.0
    %424 = vmatprep.subr.mxu0 0.0
    %425 = vmatpush2.msra.mxu0 0.0
    %426 = vmatprep.mubr.f32.mxu0 0.0
    %v427 = vand.u32 %v53, 4294901760
    %428 = vmatmul.mubr.f32.gmra.mxu0 %v427
    %v429 = vpop.f32.mrf.mxu0
    %v430 = vadd.f32 %v356, %v429
    %v431 = vpop.f32.mrf.mxu0
    %432 = vdwg.mxu0
    %433 = vmatprep.subr.mxu0 0.0
    %434 = vmatpush1.msra.mxu0 0.0
    %435 = vmatprep.subr.mxu0 0.0
    %436 = vmatpush1.msra.mxu0 0.0
    %437 = vmatprep.subr.mxu0 0.0
    %438 = vmatpush1.msra.mxu0 0.0
    %439 = vmatprep.subr.mxu0 0.0
    %440 = vmatpush1.msra.mxu0 0.0
    %441 = vmatprep.subr.mxu0 0.0
    %442 = vmatpush1.msra.mxu0 0.0
    %443 = vmatprep.subr.mxu0 0.0
    %444 = vmatpush1.msra.mxu0 0.0
    %445 = vmatprep.subr.mxu0 0.0
    %446 = vmatpush1.msra.mxu0 0.0
    %447 = vmatprep.subr.mxu0 0.0
    %448 = vmatpush1.msra.mxu0 0.0
    %449 = vmatprep.subr.mxu0 0.0
    %450 = vmatpush1.msra.mxu0 0.0
    %451 = vmatprep.subr.mxu0 0.0
    %452 = vmatpush1.msra.mxu0 0.0
    %453 = vmatprep.subr.mxu0 0.0
    %454 = vmatpush1.msra.mxu0 0.0
    %455 = vmatprep.subr.mxu0 0.0
    %456 = vmatpush1.msra.mxu0 0.0
    %457 = vmatprep.subr.mxu0 0.0
    %458 = vmatpush1.msra.mxu0 0.0
    %459 = vmatprep.subr.mxu0 0.0
    %460 = vmatpush1.msra.mxu0 0.0
    %461 = vmatprep.subr.mxu0 0.0
    %462 = vmatpush1.msra.mxu0 0.0
    %463 = vmatprep.subr.mxu0 0.0
    %v464 = vand.u32 %v57, 4294901760
    %465 = vmatpush1.msra.mxu0 %v464
    %466 = vmatprep.subr.mxu0 0.0
    %467 = vmatpush2.msra.mxu0 0.0
    %468 = vmatprep.subr.mxu0 0.0
    %469 = vmatpush2.msra.mxu0 0.0
    %470 = vmatprep.subr.mxu0 0.0
    %471 = vmatpush2.msra.mxu0 0.0
    %472 = vmatprep.subr.mxu0 0.0
    %473 = vmatpush2.msra.mxu0 0.0
    %474 = vmatprep.subr.mxu0 0.0
    %475 = vmatpush2.msra.mxu0 0.0
    %476 = vmatprep.subr.mxu0 0.0
    %477 = vmatpush2.msra.mxu0 0.0
    %478 = vmatprep.subr.mxu0 0.0
    %479 = vmatpush2.msra.mxu0 0.0
    %480 = vmatprep.subr.mxu0 0.0
    %481 = vmatpush2.msra.mxu0 0.0
    %482 = vmatprep.subr.mxu0 0.0
    %483 = vmatpush2.msra.mxu0 0.0
    %484 = vmatprep.subr.mxu0 0.0
    %485 = vmatpush2.msra.mxu0 0.0
    %486 = vmatprep.subr.mxu0 0.0
    %487 = vmatpush2.msra.mxu0 0.0
    %488 = vmatprep.subr.mxu0 0.0
    %489 = vmatpush2.msra.mxu0 0.0
    %490 = vmatprep.subr.mxu0 0.0
    %491 = vmatpush2.msra.mxu0 0.0
    %492 = vmatprep.subr.mxu0 0.0
    %493 = vmatpush2.msra.mxu0 0.0
    %494 = vmatprep.subr.mxu0 0.0
    %495 = vmatpush2.msra.mxu0 0.0
    %496 = vmatprep.subr.mxu0 0.0
    %497 = vmatpush2.msra.mxu0 0.0
    %498 = vmatprep.mubr.f32.mxu0 0.0
    %v499 = vand.u32 %v53, 4294901760
    %500 = vmatmul.mubr.f32.gmra.mxu0 %v499
    %v501 = vpop.f32.mrf.mxu0
    %v502 = vadd.f32 %v430, %v501
    %v503 = vpop.f32.mrf.mxu0
    %504 = vdwg.mxu0
    %v505 = vld [vmem:[%s3] sm:$0x1]
    %v507 = vlaneseq
    %v508 = vshrl.u32 %v507, 7
    %v509 = vsub.s32 0, %v508
    %v510 = vrot.slane %v505, %v509
    %v512 = vmul.f32 %v502, %v510
    %v513 = vld [vmem:[%s4] sm:$0x1]
    %v515 = vlaneseq
    %v516 = vshrl.u32 %v515, 7
    %v517 = vsub.s32 0, %v516
    %v518 = vrot.slane %v513, %v517
    %v520 = vadd.f32 %v512, %v518
    %v521 = vld [vmem:[#allocation2] sm:$0x1]
    %vm522 = vcmp.ge.f32.partialorder %v520, 0.0
    %v524 = vlaneseq
    %v525 = vshrl.u32 %v524, 7
    %v526 = vsub.s32 0, %v525
    %v527 = vrot.slane %v521, %v526
    %528 = vset.pattern.permute.xlu0 0
    %529 = vperm.xlu0 %528, %v527
    %v530 = vpop.permute.xlu0 %529
    %v532 = vmul.f32 %v530, %v520
    %v533 = vsel %vm522, %v520, %v532
    %v534 = vld [vmem:[#allocation3] sm:$0xff]
    %v535 = vld [vmem:[#allocation3 + $0x8] sm:$0xff]
    %v536 = vld [vmem:[#allocation3 + $0x10] sm:$0xff]
    %v537 = vld [vmem:[#allocation3 + $0x18] sm:$0xff]
    %v538 = vld [vmem:[#allocation3 + $0x20] sm:$0xf]
    %v539 = vld [vmem:[#allocation3 + $0x28] sm:$0xf]
    %v540 = vld [vmem:[%s7] sm:$0x3]
    %v542 = vlaneseq
    %v543 = vshrl.u32 %v542, 7
    %v544 = vsub.s32 0, %v543
    %v545 = vrot.slane %v540, %v544
    %v546 = vlaneseq
    %v547 = vshrl.u32 %v546, 7
    %v548 = vsub.s32 1, %v547
    %v549 = vrot.slane %v540, %v548
    %vm552 = vcmask 162816
    %v554 = vsel %vm552, %v533, 0
    %v557 = vsel %vm55, %v538, 0
    %v560 = vsel %vm55, %v539, 0
    %562 = vmatprep.subr.mxu0 0.0
    %563 = vmatpush1.msra.mxu0 0.0
    %564 = vmatprep.subr.mxu0 0.0
    %565 = vmatpush1.msra.mxu0 0.0
    %566 = vmatprep.subr.mxu0 0.0
    %567 = vmatpush1.msra.mxu0 0.0
    %568 = vmatprep.subr.mxu0 0.0
    %569 = vmatpush1.msra.mxu0 0.0
    %570 = vmatprep.subr.mxu0 0.0
    %571 = vmatpush1.msra.mxu0 0.0
    %572 = vmatprep.subr.mxu0 0.0
    %573 = vmatpush1.msra.mxu0 0.0
    %574 = vmatprep.subr.mxu0 0.0
    %575 = vmatpush1.msra.mxu0 0.0
    %576 = vmatprep.subr.mxu0 0.0
    %577 = vmatpush1.msra.mxu0 0.0
    %578 = vmatprep.subr.mxu0 0.0
    %579 = vmatpush1.msra.mxu0 0.0
    %580 = vmatprep.subr.mxu0 0.0
    %581 = vmatpush1.msra.mxu0 0.0
    %582 = vmatprep.subr.mxu0 0.0
    %583 = vmatpush1.msra.mxu0 0.0
    %584 = vmatprep.subr.mxu0 0.0
    %585 = vmatpush1.msra.mxu0 0.0
    %586 = vmatprep.subr.mxu0 0.0
    %587 = vmatpush1.msra.mxu0 0.0
    %v588 = vand.u32 %v560, 4294901760
    %589 = vmatprep.subr.mxu0 %v588
    %v590 = vand.u32 %v557, 4294901760
    %591 = vmatpush1.msra.mxu0 %v590
    %v592 = vand.u32 %v537, 4294901760
    %593 = vmatprep.subr.mxu0 %v592
    %v594 = vand.u32 %v536, 4294901760
    %595 = vmatpush1.msra.mxu0 %v594
    %v596 = vand.u32 %v535, 4294901760
    %597 = vmatprep.subr.mxu0 %v596
    %v598 = vand.u32 %v534, 4294901760
    %599 = vmatpush1.msra.mxu0 %v598
    %600 = vmatprep.subr.mxu0 0.0
    %601 = vmatpush2.msra.mxu0 0.0
    %602 = vmatprep.subr.mxu0 0.0
    %603 = vmatpush2.msra.mxu0 0.0
    %604 = vmatprep.subr.mxu0 0.0
    %605 = vmatpush2.msra.mxu0 0.0
    %606 = vmatprep.subr.mxu0 0.0
    %607 = vmatpush2.msra.mxu0 0.0
    %608 = vmatprep.subr.mxu0 0.0
    %609 = vmatpush2.msra.mxu0 0.0
    %610 = vmatprep.subr.mxu0 0.0
    %611 = vmatpush2.msra.mxu0 0.0
    %612 = vmatprep.subr.mxu0 0.0
    %613 = vmatpush2.msra.mxu0 0.0
    %614 = vmatprep.subr.mxu0 0.0
    %615 = vmatpush2.msra.mxu0 0.0
    %616 = vmatprep.subr.mxu0 0.0
    %617 = vmatpush2.msra.mxu0 0.0
    %618 = vmatprep.subr.mxu0 0.0
    %619 = vmatpush2.msra.mxu0 0.0
    %620 = vmatprep.subr.mxu0 0.0
    %621 = vmatpush2.msra.mxu0 0.0
    %622 = vmatprep.subr.mxu0 0.0
    %623 = vmatpush2.msra.mxu0 0.0
    %624 = vmatprep.subr.mxu0 0.0
    %625 = vmatpush2.msra.mxu0 0.0
    %626 = vmatprep.subr.mxu0 0.0
    %627 = vmatpush2.msra.mxu0 0.0
    %628 = vmatprep.subr.mxu0 0.0
    %629 = vmatpush2.msra.mxu0 0.0
    %630 = vmatprep.subr.mxu0 0.0
    %631 = vmatpush2.msra.mxu0 0.0
    %632 = vmatprep.mubr.f32.mxu0 0.0
    %v633 = vand.u32 %v554, 4294901760
    %v634 = vsub.f32 %v554, %v633
    %v635 = vand.u32 %v634, 4294901760
    %v636 = vsub.f32 %v634, %v635
    %v637 = vand.u32 %v636, 4294901760
    %638 = vmatmul.mubr.f32.gmra.mxu0 %v637
    %v639 = vpop.f32.mrf.mxu0
    %v640 = vadd.f32 %v545, %v639
    %v641 = vpop.f32.mrf.mxu0
    %v642 = vadd.f32 %v549, %v641
    %643 = vdwg.mxu0
    %644 = vmatprep.subr.mxu0 0.0
    %645 = vmatpush1.msra.mxu0 0.0
    %646 = vmatprep.subr.mxu0 0.0
    %647 = vmatpush1.msra.mxu0 0.0
    %648 = vmatprep.subr.mxu0 0.0
    %649 = vmatpush1.msra.mxu0 0.0
    %650 = vmatprep.subr.mxu0 0.0
    %651 = vmatpush1.msra.mxu0 0.0
    %652 = vmatprep.subr.mxu0 0.0
    %653 = vmatpush1.msra.mxu0 0.0
    %654 = vmatprep.subr.mxu0 0.0
    %655 = vmatpush1.msra.mxu0 0.0
    %656 = vmatprep.subr.mxu0 0.0
    %657 = vmatpush1.msra.mxu0 0.0
    %658 = vmatprep.subr.mxu0 0.0
    %659 = vmatpush1.msra.mxu0 0.0
    %660 = vmatprep.subr.mxu0 0.0
    %661 = vmatpush1.msra.mxu0 0.0
    %662 = vmatprep.subr.mxu0 0.0
    %663 = vmatpush1.msra.mxu0 0.0
    %664 = vmatprep.subr.mxu0 0.0
    %665 = vmatpush1.msra.mxu0 0.0
    %666 = vmatprep.subr.mxu0 0.0
    %667 = vmatpush1.msra.mxu0 0.0
    %668 = vmatprep.subr.mxu0 0.0
    %669 = vmatpush1.msra.mxu0 0.0
    %v670 = vand.u32 %v560, 4294901760
    %v671 = vsub.f32 %v560, %v670
    %v672 = vand.u32 %v671, 4294901760
    %v673 = vsub.f32 %v671, %v672
    %v674 = vand.u32 %v673, 4294901760
    %675 = vmatprep.subr.mxu0 %v674
    %v676 = vand.u32 %v557, 4294901760
    %v677 = vsub.f32 %v557, %v676
    %v678 = vand.u32 %v677, 4294901760
    %v679 = vsub.f32 %v677, %v678
    %v680 = vand.u32 %v679, 4294901760
    %681 = vmatpush1.msra.mxu0 %v680
    %v682 = vand.u32 %v537, 4294901760
    %v683 = vsub.f32 %v537, %v682
    %v684 = vand.u32 %v683, 4294901760
    %v685 = vsub.f32 %v683, %v684
    %v686 = vand.u32 %v685, 4294901760
    %687 = vmatprep.subr.mxu0 %v686
    %v688 = vand.u32 %v536, 4294901760
    %v689 = vsub.f32 %v536, %v688
    %v690 = vand.u32 %v689, 4294901760
    %v691 = vsub.f32 %v689, %v690
    %v692 = vand.u32 %v691, 4294901760
    %693 = vmatpush1.msra.mxu0 %v692
    %v694 = vand.u32 %v535, 4294901760
    %v695 = vsub.f32 %v535, %v694
    %v696 = vand.u32 %v695, 4294901760
    %v697 = vsub.f32 %v695, %v696
    %v698 = vand.u32 %v697, 4294901760
    %699 = vmatprep.subr.mxu0 %v698
    %v700 = vand.u32 %v534, 4294901760
    %v701 = vsub.f32 %v534, %v700
    %v702 = vand.u32 %v701, 4294901760
    %v703 = vsub.f32 %v701, %v702
    %v704 = vand.u32 %v703, 4294901760
    %705 = vmatpush1.msra.mxu0 %v704
    %706 = vmatprep.subr.mxu0 0.0
    %707 = vmatpush2.msra.mxu0 0.0
    %708 = vmatprep.subr.mxu0 0.0
    %709 = vmatpush2.msra.mxu0 0.0
    %710 = vmatprep.subr.mxu0 0.0
    %711 = vmatpush2.msra.mxu0 0.0
    %712 = vmatprep.subr.mxu0 0.0
    %713 = vmatpush2.msra.mxu0 0.0
    %714 = vmatprep.subr.mxu0 0.0
    %715 = vmatpush2.msra.mxu0 0.0
    %716 = vmatprep.subr.mxu0 0.0
    %717 = vmatpush2.msra.mxu0 0.0
    %718 = vmatprep.subr.mxu0 0.0
    %719 = vmatpush2.msra.mxu0 0.0
    %720 = vmatprep.subr.mxu0 0.0
    %721 = vmatpush2.msra.mxu0 0.0
    %722 = vmatprep.subr.mxu0 0.0
    %723 = vmatpush2.msra.mxu0 0.0
    %724 = vmatprep.subr.mxu0 0.0
    %725 = vmatpush2.msra.mxu0 0.0
    %726 = vmatprep.subr.mxu0 0.0
    %727 = vmatpush2.msra.mxu0 0.0
    %728 = vmatprep.subr.mxu0 0.0
    %729 = vmatpush2.msra.mxu0 0.0
    %730 = vmatprep.subr.mxu0 0.0
    %731 = vmatpush2.msra.mxu0 0.0
    %732 = vmatprep.subr.mxu0 0.0
    %733 = vmatpush2.msra.mxu0 0.0
    %734 = vmatprep.subr.mxu0 0.0
    %735 = vmatpush2.msra.mxu0 0.0
    %736 = vmatprep.subr.mxu0 0.0
    %737 = vmatpush2.msra.mxu0 0.0
    %738 = vmatprep.mubr.f32.mxu0 0.0
    %v739 = vand.u32 %v554, 4294901760
    %740 = vmatmul.mubr.f32.gmra.mxu0 %v739
    %v741 = vpop.f32.mrf.mxu0
    %v742 = vadd.f32 %v640, %v741
    %v743 = vpop.f32.mrf.mxu0
    %v744 = vadd.f32 %v642, %v743
    %745 = vdwg.mxu0
    %746 = vmatprep.subr.mxu0 0.0
    %747 = vmatpush1.msra.mxu0 0.0
    %748 = vmatprep.subr.mxu0 0.0
    %749 = vmatpush1.msra.mxu0 0.0
    %750 = vmatprep.subr.mxu0 0.0
    %751 = vmatpush1.msra.mxu0 0.0
    %752 = vmatprep.subr.mxu0 0.0
    %753 = vmatpush1.msra.mxu0 0.0
    %754 = vmatprep.subr.mxu0 0.0
    %755 = vmatpush1.msra.mxu0 0.0
    %756 = vmatprep.subr.mxu0 0.0
    %757 = vmatpush1.msra.mxu0 0.0
    %758 = vmatprep.subr.mxu0 0.0
    %759 = vmatpush1.msra.mxu0 0.0
    %760 = vmatprep.subr.mxu0 0.0
    %761 = vmatpush1.msra.mxu0 0.0
    %762 = vmatprep.subr.mxu0 0.0
    %763 = vmatpush1.msra.mxu0 0.0
    %764 = vmatprep.subr.mxu0 0.0
    %765 = vmatpush1.msra.mxu0 0.0
    %766 = vmatprep.subr.mxu0 0.0
    %767 = vmatpush1.msra.mxu0 0.0
    %768 = vmatprep.subr.mxu0 0.0
    %769 = vmatpush1.msra.mxu0 0.0
    %770 = vmatprep.subr.mxu0 0.0
    %771 = vmatpush1.msra.mxu0 0.0
    %v772 = vand.u32 %v560, 4294901760
    %v773 = vsub.f32 %v560, %v772
    %774 = vmatprep.subr.mxu0 %v773
    %v775 = vand.u32 %v557, 4294901760
    %v776 = vsub.f32 %v557, %v775
    %777 = vmatpush1.msra.mxu0 %v776
    %v778 = vand.u32 %v537, 4294901760
    %v779 = vsub.f32 %v537, %v778
    %780 = vmatprep.subr.mxu0 %v779
    %v781 = vand.u32 %v536, 4294901760
    %v782 = vsub.f32 %v536, %v781
    %783 = vmatpush1.msra.mxu0 %v782
    %v784 = vand.u32 %v535, 4294901760
    %v785 = vsub.f32 %v535, %v784
    %786 = vmatprep.subr.mxu0 %v785
    %v787 = vand.u32 %v534, 4294901760
    %v788 = vsub.f32 %v534, %v787
    %789 = vmatpush1.msra.mxu0 %v788
    %790 = vmatprep.subr.mxu0 0.0
    %791 = vmatpush2.msra.mxu0 0.0
    %792 = vmatprep.subr.mxu0 0.0
    %793 = vmatpush2.msra.mxu0 0.0
    %794 = vmatprep.subr.mxu0 0.0
    %795 = vmatpush2.msra.mxu0 0.0
    %796 = vmatprep.subr.mxu0 0.0
    %797 = vmatpush2.msra.mxu0 0.0
    %798 = vmatprep.subr.mxu0 0.0
    %799 = vmatpush2.msra.mxu0 0.0
    %800 = vmatprep.subr.mxu0 0.0
    %801 = vmatpush2.msra.mxu0 0.0
    %802 = vmatprep.subr.mxu0 0.0
    %803 = vmatpush2.msra.mxu0 0.0
    %804 = vmatprep.subr.mxu0 0.0
    %805 = vmatpush2.msra.mxu0 0.0
    %806 = vmatprep.subr.mxu0 0.0
    %807 = vmatpush2.msra.mxu0 0.0
    %808 = vmatprep.subr.mxu0 0.0
    %809 = vmatpush2.msra.mxu0 0.0
    %810 = vmatprep.subr.mxu0 0.0
    %811 = vmatpush2.msra.mxu0 0.0
    %812 = vmatprep.subr.mxu0 0.0
    %813 = vmatpush2.msra.mxu0 0.0
    %814 = vmatprep.subr.mxu0 0.0
    %815 = vmatpush2.msra.mxu0 0.0
    %816 = vmatprep.subr.mxu0 0.0
    %817 = vmatpush2.msra.mxu0 0.0
    %818 = vmatprep.subr.mxu0 0.0
    %819 = vmatpush2.msra.mxu0 0.0
    %820 = vmatprep.subr.mxu0 0.0
    %821 = vmatpush2.msra.mxu0 0.0
    %822 = vmatprep.mubr.f32.mxu0 0.0
    %v823 = vand.u32 %v554, 4294901760
    %v824 = vsub.f32 %v554, %v823
    %825 = vmatmul.mubr.f32.gmra.mxu0 %v824
    %v826 = vpop.f32.mrf.mxu0
    %v827 = vadd.f32 %v742, %v826
    %v828 = vpop.f32.mrf.mxu0
    %v829 = vadd.f32 %v744, %v828
    %830 = vdwg.mxu0
    %831 = vmatprep.subr.mxu0 0.0
    %832 = vmatpush1.msra.mxu0 0.0
    %833 = vmatprep.subr.mxu0 0.0
    %834 = vmatpush1.msra.mxu0 0.0
    %835 = vmatprep.subr.mxu0 0.0
    %836 = vmatpush1.msra.mxu0 0.0
    %837 = vmatprep.subr.mxu0 0.0
    %838 = vmatpush1.msra.mxu0 0.0
    %839 = vmatprep.subr.mxu0 0.0
    %840 = vmatpush1.msra.mxu0 0.0
    %841 = vmatprep.subr.mxu0 0.0
    %842 = vmatpush1.msra.mxu0 0.0
    %843 = vmatprep.subr.mxu0 0.0
    %844 = vmatpush1.msra.mxu0 0.0
    %845 = vmatprep.subr.mxu0 0.0
    %846 = vmatpush1.msra.mxu0 0.0
    %847 = vmatprep.subr.mxu0 0.0
    %848 = vmatpush1.msra.mxu0 0.0
    %849 = vmatprep.subr.mxu0 0.0
    %850 = vmatpush1.msra.mxu0 0.0
    %851 = vmatprep.subr.mxu0 0.0
    %852 = vmatpush1.msra.mxu0 0.0
    %853 = vmatprep.subr.mxu0 0.0
    %854 = vmatpush1.msra.mxu0 0.0
    %855 = vmatprep.subr.mxu0 0.0
    %856 = vmatpush1.msra.mxu0 0.0
    %v857 = vand.u32 %v560, 4294901760
    %858 = vmatprep.subr.mxu0 %v857
    %v859 = vand.u32 %v557, 4294901760
    %860 = vmatpush1.msra.mxu0 %v859
    %v861 = vand.u32 %v537, 4294901760
    %862 = vmatprep.subr.mxu0 %v861
    %v863 = vand.u32 %v536, 4294901760
    %864 = vmatpush1.msra.mxu0 %v863
    %v865 = vand.u32 %v535, 4294901760
    %866 = vmatprep.subr.mxu0 %v865
    %v867 = vand.u32 %v534, 4294901760
    %868 = vmatpush1.msra.mxu0 %v867
    %869 = vmatprep.subr.mxu0 0.0
    %870 = vmatpush2.msra.mxu0 0.0
    %871 = vmatprep.subr.mxu0 0.0
    %872 = vmatpush2.msra.mxu0 0.0
    %873 = vmatprep.subr.mxu0 0.0
    %874 = vmatpush2.msra.mxu0 0.0
    %875 = vmatprep.subr.mxu0 0.0
    %876 = vmatpush2.msra.mxu0 0.0
    %877 = vmatprep.subr.mxu0 0.0
    %878 = vmatpush2.msra.mxu0 0.0
    %879 = vmatprep.subr.mxu0 0.0
    %880 = vmatpush2.msra.mxu0 0.0
    %881 = vmatprep.subr.mxu0 0.0
    %882 = vmatpush2.msra.mxu0 0.0
    %883 = vmatprep.subr.mxu0 0.0
    %884 = vmatpush2.msra.mxu0 0.0
    %885 = vmatprep.subr.mxu0 0.0
    %886 = vmatpush2.msra.mxu0 0.0
    %887 = vmatprep.subr.mxu0 0.0
    %888 = vmatpush2.msra.mxu0 0.0
    %889 = vmatprep.subr.mxu0 0.0
    %890 = vmatpush2.msra.mxu0 0.0
    %891 = vmatprep.subr.mxu0 0.0
    %892 = vmatpush2.msra.mxu0 0.0
    %893 = vmatprep.subr.mxu0 0.0
    %894 = vmatpush2.msra.mxu0 0.0
    %895 = vmatprep.subr.mxu0 0.0
    %896 = vmatpush2.msra.mxu0 0.0
    %897 = vmatprep.subr.mxu0 0.0
    %898 = vmatpush2.msra.mxu0 0.0
    %899 = vmatprep.subr.mxu0 0.0
    %900 = vmatpush2.msra.mxu0 0.0
    %901 = vmatprep.mubr.f32.mxu0 0.0
    %v902 = vand.u32 %v554, 4294901760
    %v903 = vsub.f32 %v554, %v902
    %v904 = vand.u32 %v903, 4294901760
    %905 = vmatmul.mubr.f32.gmra.mxu0 %v904
    %v906 = vpop.f32.mrf.mxu0
    %v907 = vadd.f32 %v827, %v906
    %v908 = vpop.f32.mrf.mxu0
    %v909 = vadd.f32 %v829, %v908
    %910 = vdwg.mxu0
    %911 = vmatprep.subr.mxu0 0.0
    %912 = vmatpush1.msra.mxu0 0.0
    %913 = vmatprep.subr.mxu0 0.0
    %914 = vmatpush1.msra.mxu0 0.0
    %915 = vmatprep.subr.mxu0 0.0
    %916 = vmatpush1.msra.mxu0 0.0
    %917 = vmatprep.subr.mxu0 0.0
    %918 = vmatpush1.msra.mxu0 0.0
    %919 = vmatprep.subr.mxu0 0.0
    %920 = vmatpush1.msra.mxu0 0.0
    %921 = vmatprep.subr.mxu0 0.0
    %922 = vmatpush1.msra.mxu0 0.0
    %923 = vmatprep.subr.mxu0 0.0
    %924 = vmatpush1.msra.mxu0 0.0
    %925 = vmatprep.subr.mxu0 0.0
    %926 = vmatpush1.msra.mxu0 0.0
    %927 = vmatprep.subr.mxu0 0.0
    %928 = vmatpush1.msra.mxu0 0.0
    %929 = vmatprep.subr.mxu0 0.0
    %930 = vmatpush1.msra.mxu0 0.0
    %931 = vmatprep.subr.mxu0 0.0
    %932 = vmatpush1.msra.mxu0 0.0
    %933 = vmatprep.subr.mxu0 0.0
    %934 = vmatpush1.msra.mxu0 0.0
    %935 = vmatprep.subr.mxu0 0.0
    %936 = vmatpush1.msra.mxu0 0.0
    %v937 = vand.u32 %v560, 4294901760
    %v938 = vsub.f32 %v560, %v937
    %v939 = vand.u32 %v938, 4294901760
    %940 = vmatprep.subr.mxu0 %v939
    %v941 = vand.u32 %v557, 4294901760
    %v942 = vsub.f32 %v557, %v941
    %v943 = vand.u32 %v942, 4294901760
    %944 = vmatpush1.msra.mxu0 %v943
    %v945 = vand.u32 %v537, 4294901760
    %v946 = vsub.f32 %v537, %v945
    %v947 = vand.u32 %v946, 4294901760
    %948 = vmatprep.subr.mxu0 %v947
    %v949 = vand.u32 %v536, 4294901760
    %v950 = vsub.f32 %v536, %v949
    %v951 = vand.u32 %v950, 4294901760
    %952 = vmatpush1.msra.mxu0 %v951
    %v953 = vand.u32 %v535, 4294901760
    %v954 = vsub.f32 %v535, %v953
    %v955 = vand.u32 %v954, 4294901760
    %956 = vmatprep.subr.mxu0 %v955
    %v957 = vand.u32 %v534, 4294901760
    %v958 = vsub.f32 %v534, %v957
    %v959 = vand.u32 %v958, 4294901760
    %960 = vmatpush1.msra.mxu0 %v959
    %961 = vmatprep.subr.mxu0 0.0
    %962 = vmatpush2.msra.mxu0 0.0
    %963 = vmatprep.subr.mxu0 0.0
    %964 = vmatpush2.msra.mxu0 0.0
    %965 = vmatprep.subr.mxu0 0.0
    %966 = vmatpush2.msra.mxu0 0.0
    %967 = vmatprep.subr.mxu0 0.0
    %968 = vmatpush2.msra.mxu0 0.0
    %969 = vmatprep.subr.mxu0 0.0
    %970 = vmatpush2.msra.mxu0 0.0
    %971 = vmatprep.subr.mxu0 0.0
    %972 = vmatpush2.msra.mxu0 0.0
    %973 = vmatprep.subr.mxu0 0.0
    %974 = vmatpush2.msra.mxu0 0.0
    %975 = vmatprep.subr.mxu0 0.0
    %976 = vmatpush2.msra.mxu0 0.0
    %977 = vmatprep.subr.mxu0 0.0
    %978 = vmatpush2.msra.mxu0 0.0
    %979 = vmatprep.subr.mxu0 0.0
    %980 = vmatpush2.msra.mxu0 0.0
    %981 = vmatprep.subr.mxu0 0.0
    %982 = vmatpush2.msra.mxu0 0.0
    %983 = vmatprep.subr.mxu0 0.0
    %984 = vmatpush2.msra.mxu0 0.0
    %985 = vmatprep.subr.mxu0 0.0
    %986 = vmatpush2.msra.mxu0 0.0
    %987 = vmatprep.subr.mxu0 0.0
    %988 = vmatpush2.msra.mxu0 0.0
    %989 = vmatprep.subr.mxu0 0.0
    %990 = vmatpush2.msra.mxu0 0.0
    %991 = vmatprep.subr.mxu0 0.0
    %992 = vmatpush2.msra.mxu0 0.0
    %993 = vmatprep.mubr.f32.mxu0 0.0
    %v994 = vand.u32 %v554, 4294901760
    %995 = vmatmul.mubr.f32.gmra.mxu0 %v994
    %v996 = vpop.f32.mrf.mxu0
    %v997 = vadd.f32 %v907, %v996
    %v998 = vpop.f32.mrf.mxu0
    %v999 = vadd.f32 %v909, %v998
    %1000 = vdwg.mxu0
    %1001 = vmatprep.subr.mxu0 0.0
    %1002 = vmatpush1.msra.mxu0 0.0
    %1003 = vmatprep.subr.mxu0 0.0
    %1004 = vmatpush1.msra.mxu0 0.0
    %1005 = vmatprep.subr.mxu0 0.0
    %1006 = vmatpush1.msra.mxu0 0.0
    %1007 = vmatprep.subr.mxu0 0.0
    %1008 = vmatpush1.msra.mxu0 0.0
    %1009 = vmatprep.subr.mxu0 0.0
    %1010 = vmatpush1.msra.mxu0 0.0
    %1011 = vmatprep.subr.mxu0 0.0
    %1012 = vmatpush1.msra.mxu0 0.0
    %1013 = vmatprep.subr.mxu0 0.0
    %1014 = vmatpush1.msra.mxu0 0.0
    %1015 = vmatprep.subr.mxu0 0.0
    %1016 = vmatpush1.msra.mxu0 0.0
    %1017 = vmatprep.subr.mxu0 0.0
    %1018 = vmatpush1.msra.mxu0 0.0
    %1019 = vmatprep.subr.mxu0 0.0
    %1020 = vmatpush1.msra.mxu0 0.0
    %1021 = vmatprep.subr.mxu0 0.0
    %1022 = vmatpush1.msra.mxu0 0.0
    %1023 = vmatprep.subr.mxu0 0.0
    %1024 = vmatpush1.msra.mxu0 0.0
    %1025 = vmatprep.subr.mxu0 0.0
    %1026 = vmatpush1.msra.mxu0 0.0
    %v1027 = vand.u32 %v560, 4294901760
    %1028 = vmatprep.subr.mxu0 %v1027
    %v1029 = vand.u32 %v557, 4294901760
    %1030 = vmatpush1.msra.mxu0 %v1029
    %v1031 = vand.u32 %v537, 4294901760
    %1032 = vmatprep.subr.mxu0 %v1031
    %v1033 = vand.u32 %v536, 4294901760
    %1034 = vmatpush1.msra.mxu0 %v1033
    %v1035 = vand.u32 %v535, 4294901760
    %1036 = vmatprep.subr.mxu0 %v1035
    %v1037 = vand.u32 %v534, 4294901760
    %1038 = vmatpush1.msra.mxu0 %v1037
    %1039 = vmatprep.subr.mxu0 0.0
    %1040 = vmatpush2.msra.mxu0 0.0
    %1041 = vmatprep.subr.mxu0 0.0
    %1042 = vmatpush2.msra.mxu0 0.0
    %1043 = vmatprep.subr.mxu0 0.0
    %1044 = vmatpush2.msra.mxu0 0.0
    %1045 = vmatprep.subr.mxu0 0.0
    %1046 = vmatpush2.msra.mxu0 0.0
    %1047 = vmatprep.subr.mxu0 0.0
    %1048 = vmatpush2.msra.mxu0 0.0
    %1049 = vmatprep.subr.mxu0 0.0
    %1050 = vmatpush2.msra.mxu0 0.0
    %1051 = vmatprep.subr.mxu0 0.0
    %1052 = vmatpush2.msra.mxu0 0.0
    %1053 = vmatprep.subr.mxu0 0.0
    %1054 = vmatpush2.msra.mxu0 0.0
    %1055 = vmatprep.subr.mxu0 0.0
    %1056 = vmatpush2.msra.mxu0 0.0
    %1057 = vmatprep.subr.mxu0 0.0
    %1058 = vmatpush2.msra.mxu0 0.0
    %1059 = vmatprep.subr.mxu0 0.0
    %1060 = vmatpush2.msra.mxu0 0.0
    %1061 = vmatprep.subr.mxu0 0.0
    %1062 = vmatpush2.msra.mxu0 0.0
    %1063 = vmatprep.subr.mxu0 0.0
    %1064 = vmatpush2.msra.mxu0 0.0
    %1065 = vmatprep.subr.mxu0 0.0
    %1066 = vmatpush2.msra.mxu0 0.0
    %1067 = vmatprep.subr.mxu0 0.0
    %1068 = vmatpush2.msra.mxu0 0.0
    %1069 = vmatprep.subr.mxu0 0.0
    %1070 = vmatpush2.msra.mxu0 0.0
    %1071 = vmatprep.mubr.f32.mxu0 0.0
    %v1072 = vand.u32 %v554, 4294901760
    %1073 = vmatmul.mubr.f32.gmra.mxu0 %v1072
    %v1074 = vpop.f32.mrf.mxu0
    %v1075 = vadd.f32 %v997, %v1074
    %v1076 = vpop.f32.mrf.mxu0
    %v1077 = vadd.f32 %v999, %v1076
    %1078 = vdwg.mxu0
    %1079 = vst [vmem:[#allocation6] sm:$0xff] %v1075
    %vm1080 = vcmask 523264
    %1081 = vst.msk [vmem:[#allocation6 + $0x8] sm:$0xff] %vm1080, %v1077
    %v1082 = vld [vmem:[%s1] sm:$0xff]
    %v1083 = vld [vmem:[%s8] sm:$0x1]
    %v1085 = vlaneseq
    %v1086 = vshrl.u32 %v1085, 7
    %v1087 = vsub.s32 0, %v1086
    %v1088 = vrot.slane %v1083, %v1087
    %v1090 = vadd.f32 %v1082, %v1088
    %1091 = vst.msk [vmem:[#allocation6] sm:$0xff] %vm1080, %v1090
    // Predicated region
    $region42: #{tpu_custom_call.1} parent=1 // pred_check
      _
    $region43: #{tpu_custom_call.1} parent=1 // pred_check_branch
      %1093 = sbr.rel (0) target = $region45
    $region44: #{tpu_custom_call.1} parent=1 // pred_region
      %s1095 = ssub.s32 256, 256
      %1096 = vsyncadd [#allocation5], %s1095
      %s1098 = sshll.u32 [#allocation6], 4
      %s1099 = int_to_ptr.vmem [resolvable:$true] %s1098
      %1101 = dma.vmem_to_hbm [thread:$0]  %s1099, 256, %s9, [#allocation5]
    $region45: #{tpu_custom_call.1} parent=1 // pred_fallthru
      _
    // Predicated region
    $region46: #{tpu_custom_call.1} parent=1 // pred_check
      _
    $region47: #{tpu_custom_call.1} parent=1 // pred_check_branch
      %1103 = sbr.rel (0) target = $region49
    $region48: #{tpu_custom_call.1} parent=1 // pred_region
      %1104 = dma.done [#allocation5], 256
    $region49: #{tpu_custom_call.1} parent=1 // pred_fallthru
      _
    %1105 = vsyncpa [#allocation4], 1
    %1106 = vsyncpa [#allocation5], 1

</llo_original>
